<compile_context>
chip_gen: v6e
topology: v6e:2x2x1
jax: 0.10.0
libtpu: 0.0.40
codegen_flags: <defaults>
</compile_context>

<pallas_src>
import jax
import jax.numpy as jnp
from jax.experimental import pallas as pl
from jax.experimental.pallas import tpu as pltpu


def conv1d_relu_kernel(x_ref, w_ref, b_ref, o_ref):
    # x_ref: (TB, C_in, Lp)   input tile (Lp = L rounded up to 128 lanes)
    # w_ref: (C_out, 3*C_in)  im2col weights, tap-major: [tap0 | tap1 | tap2]
    # b_ref: (C_out, 1)       bias
    # o_ref: (TB, C_out, Lp)  output tile
    TB, C_in, Lp = x_ref.shape
    C_out = w_ref.shape[0]

    x = x_ref[...]                                                  # (TB, C_in, Lp)

    # Build the +/-1 halo in-kernel (conv padding=1): zero column at each edge.
    zero_col = jnp.zeros((TB, C_in, 1), dtype=x.dtype)
    x_prev = jnp.concatenate([zero_col, x[:, :, :Lp - 1]], axis=2)  # x[..., l-1]
    x_next = jnp.concatenate([x[:, :, 1:], zero_col], axis=2)       # x[..., l+1]

    # im2col stack: (TB, 3*C_in, Lp); channel blocks ordered tap0 | tap1 | tap2
    # to match the wrapper's weight flattening.
    stacked = jnp.concatenate([x_prev, x, x_next], axis=1)

    # Single fused MXU contraction (batched over the TB batch rows).
    w = jnp.broadcast_to(w_ref[...][None], (TB, C_out, 3 * C_in))
    y = jnp.einsum("bok,bkl->bol", w, stacked,
                   preferred_element_type=jnp.float32)              # (TB, C_out, Lp)

    y = y + b_ref[...][None, :, :]                                  # bias broadcast
    o_ref[...] = jnp.maximum(y, 0.0).astype(o_ref.dtype)


def _round_up(v, m):
    return (v + m - 1) // m * m


def conv1d_relu(x, weight, bias, *, block_batch=None):
    """Conv1d(kernel_size=3, padding=1) + ReLU.

    x: (B, C_in, L) ; weight: (C_out, C_in, 3) ; bias: (C_out,).
    """
    B, C_in, L = x.shape
    C_out, _, ktaps = weight.shape
    assert ktaps == 3

    # Lane-dense output: pad L up to a multiple of 128 (no-op when already aligned).
    Lp = _round_up(max(L, 128), 128)

    if block_batch is None:
        # Per-step VMEM footprint ~ TB * Lp * 4 * (7*C_in + 3*C_out) bytes
        # (double-buffered in/out blocks + x_prev/x_next/stacked/acc temps).
        # Keep it <= ~12 MiB: fits v5e's 16 MiB scoped default and v7x's
        # 64 MiB physical VMEM; v6e has plenty of headroom either way.
        per_batch = Lp * 4 * (7 * C_in + 3 * C_out)
        block_batch = max(1, min(B, (12 << 20) // max(per_batch, 1), 64))
        # Keep >= 2 grid steps when B allows so v7x's two TensorCores both get
        # work on the "parallel" batch axis (harmless on single-TC chips).
        if B > 1:
            block_batch = min(block_batch, -(-B // 2))
    TB = block_batch
    Bp = _round_up(B, TB)

    xp = x
    if (Bp, Lp) != (B, L):
        # Glue: zero-pad batch to a TB multiple and length to Lp.  This is the
        # only host-side pad (the old full (B, C_in, L+2) halo copy is gone).
        xp = jnp.pad(x, ((0, Bp - B), (0, 0), (0, Lp - L)))

    # im2col weight layout: (C_out, C_in, 3) -> (C_out, 3, C_in) -> (C_out, 3*C_in)
    # so column j*C_in + c holds W[o, c, j]; matches the kernel's
    # [x_prev | x | x_next] channel stacking (taps major).
    w_flat = jnp.transpose(weight, (0, 2, 1)).reshape(C_out, 3 * C_in)
    w_flat = w_flat.astype(jnp.float32)
    bias2d = bias.reshape(C_out, 1).astype(jnp.float32)

    out = pl.pallas_call(
        conv1d_relu_kernel,
        out_shape=jax.ShapeDtypeStruct((Bp, C_out, Lp), x.dtype),
        grid_spec=pltpu.PrefetchScalarGridSpec(
            num_scalar_prefetch=0,
            grid=(Bp // TB,),
            in_specs=[
                pl.BlockSpec((TB, C_in, Lp), lambda i: (i, 0, 0)),
                pl.BlockSpec((C_out, 3 * C_in), lambda i: (0, 0)),
                pl.BlockSpec((C_out, 1), lambda i: (0, 0)),
            ],
            out_specs=pl.BlockSpec((TB, C_out, Lp), lambda i: (i, 0, 0)),
        ),
        compiler_params=pltpu.CompilerParams(
            dimension_semantics=("parallel",)),
    )(xp, w_flat, bias2d)

    # Strip batch / lane padding.
    return out[:B, :, :L]


if __name__ == "__main__":
    # Small shapes consistent with the module's forward (NCL conv input).
    B, C_in, C_out, L = 2, 4, 8, 16

    key = jax.random.PRNGKey(0)
    kx, kw, kb = jax.random.split(key, 3)

    # Deterministic parameter init mirroring PyTorch Conv1d default
    # (uniform(-bound, bound), bound = 1/sqrt(C_in * kernel_size)).
    bound = 1.0 / (C_in * 3) ** 0.5
    x = jax.random.normal(kx, (B, C_in, L), dtype=jnp.float32)
    weight = jax.random.uniform(kw, (C_out, C_in, 3), dtype=jnp.float32,
                                minval=-bound, maxval=bound)
    bias = jax.random.uniform(kb, (C_out,), dtype=jnp.float32,
                              minval=-bound, maxval=bound)

    out = conv1d_relu(x, weight, bias)
    out = jax.block_until_ready(out)

    # Cross-check against a plain-JAX reference of the same conv + ReLU.
    ref = jax.lax.conv_general_dilated(
        x, weight, window_strides=(1,), padding=((1, 1),),
        dimension_numbers=("NCH", "OIH", "NCH"))
    ref = jnp.maximum(ref + bias[None, :, None], 0.0)
    assert out.shape == (B, C_out, L)
    assert jnp.allclose(out, ref, atol=1e-5, rtol=1e-5)

    print("KERNEL_OK")
</pallas_src>

<mosaic_0001>
module attributes {stable_mosaic.version = 11 : i64} {
  func.func @conv1d_relu_kernel(%arg0: i32, %arg1: memref<1x4x128xf32, #tpu.memory_space<vmem>>, %arg2: memref<8x12xf32, #tpu.memory_space<vmem>>, %arg3: memref<8x1xf32, #tpu.memory_space<vmem>>, %arg4: memref<1x8x128xf32, #tpu.memory_space<vmem>>) attributes {dimension_semantics = [#tpu.dimension_semantics<parallel>], iteration_bounds = array<i64: 2>, scalar_prefetch = 0 : i64, scratch_operands = 0 : i64, tpu.core_type = #tpu.core_type<tc>, window_params = [{transform_indices = @transform_0, window_bounds = array<i64: 1, 4, 128>}, {pipeline_mode = #tpu.pipeline_mode<synchronous>, transform_indices = @transform_1, window_bounds = array<i64: 8, 12>}, {pipeline_mode = #tpu.pipeline_mode<synchronous>, transform_indices = @transform_2, window_bounds = array<i64: 8, 1>}, {transform_indices = @transform_3, window_bounds = array<i64: 1, 8, 128>}]} {
    %c0 = arith.constant 0 : index
    %c0_0 = arith.constant 0 : index
    %c0_1 = arith.constant 0 : index
    %0 = vector.load %arg1[%c0, %c0_0, %c0_1] : memref<1x4x128xf32, #tpu.memory_space<vmem>>, vector<1x4x128xf32>
    %cst = arith.constant 0.000000e+00 : f32
    %1 = vector.broadcast %cst : f32 to vector<1x4x1xf32>
    %2 = vector.extract_strided_slice %0 {offsets = [0, 0, 0], sizes = [1, 4, 127], strides = [1, 1, 1]} : vector<1x4x128xf32> to vector<1x4x127xf32>
    %3 = tpu.concatenate %1, %2 in 2 : vector<1x4x1xf32>, vector<1x4x127xf32> -> vector<1x4x128xf32>
    %4 = vector.extract_strided_slice %0 {offsets = [0, 0, 1], sizes = [1, 4, 127], strides = [1, 1, 1]} : vector<1x4x128xf32> to vector<1x4x127xf32>
    %5 = tpu.concatenate %4, %1 in 2 : vector<1x4x127xf32>, vector<1x4x1xf32> -> vector<1x4x128xf32>
    %6 = tpu.concatenate %3, %0, %5 in 1 : vector<1x4x128xf32>, vector<1x4x128xf32>, vector<1x4x128xf32> -> vector<1x12x128xf32>
    %c0_2 = arith.constant 0 : index
    %c0_3 = arith.constant 0 : index
    %7 = vector.load %arg2[%c0_2, %c0_3] : memref<8x12xf32, #tpu.memory_space<vmem>>, vector<8x12xf32>
    %8 = vector.shape_cast %7 : vector<8x12xf32> to vector<1x8x12xf32>
    "tpu.trace_start"() <{level = 10 : i32, message = "bok,bkl->bol"}> : () -> ()
    %cst_4 = arith.constant dense<0.000000e+00> : vector<1x8x128xf32>
    %9 = tpu.matmul %8, %6, %cst_4 {dimension_numbers = #tpu.dot_dimension_numbers<[2], [1], [1], [2], [0, 0, 0, 1, 1, 2], [0], [0]>} : vector<1x8x12xf32>, vector<1x12x128xf32>, vector<1x8x128xf32> -> vector<1x8x128xf32>
    "tpu.trace_stop"() : () -> ()
    %c0_5 = arith.constant 0 : index
    %c0_6 = arith.constant 0 : index
    %10 = vector.load %arg3[%c0_5, %c0_6] : memref<8x1xf32, #tpu.memory_space<vmem>>, vector<8x1xf32>
    %11 = vector.shape_cast %10 : vector<8x1xf32> to vector<1x8x1xf32>
    %12 = vector.broadcast %11 : vector<1x8x1xf32> to vector<1x8x128xf32>
    %13 = arith.addf %9, %12 : vector<1x8x128xf32>
    %cst_7 = arith.constant 0.000000e+00 : f32
    %14 = vector.broadcast %cst_7 : f32 to vector<1x8x128xf32>
    %15 = arith.maximumf %13, %14 : vector<1x8x128xf32>
    %c0_8 = arith.constant 0 : index
    %c0_9 = arith.constant 0 : index
    %c0_10 = arith.constant 0 : index
    %16 = vector.load %arg4[%c0_8, %c0_9, %c0_10] : memref<1x8x128xf32, #tpu.memory_space<vmem>>, vector<1x8x128xf32>
    tpu.vector_store %arg4[%c0_8, %c0_9, %c0_10], %15 {strides = array<i32>} : memref<1x8x128xf32, #tpu.memory_space<vmem>>, vector<1x8x128xf32>,
    return
  }
  func.func @transform_0(%arg0: i32) -> (i32, i32, i32) {
    %c0_i32 = arith.constant 0 : i32
    %c0_i32_0 = arith.constant 0 : i32
    %c0_i32_1 = arith.constant 0 : i32
    return %arg0, %c0_i32, %c0_i32_0 : i32, i32, i32
  }
  func.func @transform_1(%arg0: i32) -> (i32, i32) {
    %c0_i32 = arith.constant 0 : i32
    %c0_i32_0 = arith.constant 0 : i32
    %c0_i32_1 = arith.constant 0 : i32
    return %c0_i32, %c0_i32_0 : i32, i32
  }
  func.func @transform_2(%arg0: i32) -> (i32, i32) {
    %c0_i32 = arith.constant 0 : i32
    %c0_i32_0 = arith.constant 0 : i32
    %c0_i32_1 = arith.constant 0 : i32
    return %c0_i32, %c0_i32_0 : i32, i32
  }
  func.func @transform_3(%arg0: i32) -> (i32, i32, i32) {
    %c0_i32 = arith.constant 0 : i32
    %c0_i32_0 = arith.constant 0 : i32
    %c0_i32_1 = arith.constant 0 : i32
    return %arg0, %c0_i32, %c0_i32_0 : i32, i32, i32
  }
}

</mosaic_0001>

<llo_original>
// kernel: tpu_custom_call.1
$region0: #{tpu_custom_call.1}
  #allocation0 [shape = 'u32[]', space=smem, size = 0x4, offset = 0x4, fixed_abs, tag = 'smem constant byte address 0x4 - core index']
  #allocation1 [shape = 'u32[144,128]{1,0:T(1,128)}', space=vmem, size = 0x12000, scoped, tag = 'internal scratch']
  %s0 = inlined_call_operand.vmem [shape: f32[2,4,128], index: 0, kind: input, shape index: {}]
  %s1 = inlined_call_operand.hbm [shape: f32[8,12], index: 1, kind: input, shape index: {}]
  %s2 = inlined_call_operand.vmem [shape: f32[8,1], index: 2, kind: input, shape index: {}]
  %s3 = inlined_call_operand.hbm [shape: f32[2,8,128], index: 3, kind: output, shape index: {}]
  %s4 = sld [smem:[#allocation0]]
  $region49: #{tpu_custom_call.1} parent=0
    _
  %s6 = ssub.s32 1, %s4
  %s7 = scalar_select 0, %s6, %s4
  $region1: #{tpu_custom_call.1} parent=0
    #allocation2 [shape = 'u8[4096]{0}', space=vmem, size = 0x1000, scoped, tag = 'input window, operand 1, single buffered']
    #allocation3 [shape = 's32[2]{0}', space=sflag, size = 0x8, scoped, tag = 'scoped memory for tpu_custom_call.1']
    #allocation4 [shape = 's32[2]{0}', space=sflag, size = 0x8, scoped, tag = 'scoped memory for tpu_custom_call.1']
    #allocation5 [shape = 'u8[8192]{0}', space=vmem, size = 0x2000, scoped, tag = 'output window, operand 0']
    %8 = vsyncpa [#allocation3], 0
    %9 = vsyncpa [#allocation4], 0
    %s10 = scalar_lea.sflag [#allocation4], 1
    %11 = vsyncpa %s10, 0
    loop: start=0, step=1, limit=4
    $region2: #{tpu_custom_call.1} parent=1 // loop_pre_header
      _
    $region3: #{tpu_custom_call.1} parent=1 // loop_header
      %s13 = sphi 0, %s17
      %p14 = scmp.ge.s32.totalorder %s13, 4
      %s23 = sphi 0, %s25
      %s26 = sphi 0, %s23
      %s27 = sphi 0, %s26
      %s43 = sphi 0, %s27
      %s47 = sphi 0, %s47
      %s49 = sphi 0, %s47
      %s50 = sphi 0, %s49
      %s64 = sphi 0, %s50
      %s68 = sphi 0, %s68
      %s70 = sphi 0, %s68
      %s71 = sphi 0, %s70
      %s85 = sphi 0, %s71
      %s91 = sphi 0, %s93
      %s94 = sphi 0, %s91
      %s95 = sphi 0, %s94
      %s111 = sphi 0, %s95
    $region4: #{tpu_custom_call.1} parent=1 // loop_header_branch
      %16 = sbr.rel (%p14) target = $region8
    $region5: #{tpu_custom_call.1} parent=1 // loop_body
      %s18 = ssub.s32 %s13, 1
      %s19 = ssub.s32 %s13, 2
      %s20 = sadd.s32 %s13, 1
      %s21 = ssub.s32 %s13, %s20
      %p22 = scmp.eq.s32.totalorder %s21, 0
      %s24 = sadd.s32 %s23, 1
      %s25 = scalar_select %p22, %s23, %s24
      %p28 = pneg %p22
      %p29 = scmp.eq.s32.totalorder %s13, 1
      %p30 = por %p28, %p29
      %p31 = scmp.ne.s32.totalorder %s23, %s26
      %p32 = scmp.eq.s32.totalorder %s13, 0
      %p33 = por %p31, %p32
      %p34 = scmp.ne.s32.totalorder %s23, %s26
      %p35 = scmp.eq.s32.totalorder %s18, 1
      %p36 = por %p34, %p35
      %p37 = scmp.ne.s32.totalorder %s26, %s27
      %p38 = scmp.eq.s32.totalorder %s18, 0
      %p39 = por %p37, %p38
      %p40 = scmp.ne.s32.totalorder %s26, %s27
      %p41 = scmp.eq.s32.totalorder %s19, 1
      %p42 = por %p40, %p41
      %p44 = scmp.ne.s32.totalorder %s27, %s43
      %p45 = scmp.eq.s32.totalorder %s19, 0
      %p46 = por %p44, %p45
      %s48 = sadd.s32 %s47, 1
      %p51 = scmp.eq.s32.totalorder %s13, 1
      %p52 = scmp.ne.s32.totalorder %s47, %s49
      %p53 = scmp.eq.s32.totalorder %s13, 0
      %p54 = por %p52, %p53
      %p55 = scmp.ne.s32.totalorder %s47, %s49
      %p56 = scmp.eq.s32.totalorder %s18, 1
      %p57 = por %p55, %p56
      %p58 = scmp.ne.s32.totalorder %s49, %s50
      %p59 = scmp.eq.s32.totalorder %s18, 0
      %p60 = por %p58, %p59
      %p61 = scmp.ne.s32.totalorder %s49, %s50
      %p62 = scmp.eq.s32.totalorder %s19, 1
      %p63 = por %p61, %p62
      %p65 = scmp.ne.s32.totalorder %s50, %s64
      %p66 = scmp.eq.s32.totalorder %s19, 0
      %p67 = por %p65, %p66
      %s69 = sadd.s32 %s68, 1
      %p72 = scmp.eq.s32.totalorder %s13, 1
      %p73 = scmp.ne.s32.totalorder %s68, %s70
      %p74 = scmp.eq.s32.totalorder %s13, 0
      %p75 = por %p73, %p74
      %p76 = scmp.ne.s32.totalorder %s68, %s70
      %p77 = scmp.eq.s32.totalorder %s18, 1
      %p78 = por %p76, %p77
      %p79 = scmp.ne.s32.totalorder %s70, %s71
      %p80 = scmp.eq.s32.totalorder %s18, 0
      %p81 = por %p79, %p80
      %p82 = scmp.ne.s32.totalorder %s70, %s71
      %p83 = scmp.eq.s32.totalorder %s19, 1
      %p84 = por %p82, %p83
      %p86 = scmp.ne.s32.totalorder %s71, %s85
      %p87 = scmp.eq.s32.totalorder %s19, 0
      %p88 = por %p86, %p87
      %s89 = ssub.s32 %s13, %s20
      %p90 = scmp.eq.s32.totalorder %s89, 0
      %s92 = sadd.s32 %s91, 1
      %s93 = scalar_select %p90, %s91, %s92
      %p96 = pneg %p90
      %p97 = scmp.eq.s32.totalorder %s13, 1
      %p98 = por %p96, %p97
      %p99 = scmp.ne.s32.totalorder %s91, %s94
      %p100 = scmp.eq.s32.totalorder %s13, 0
      %p101 = por %p99, %p100
      %p102 = scmp.ne.s32.totalorder %s91, %s94
      %p103 = scmp.eq.s32.totalorder %s18, 1
      %p104 = por %p102, %p103
      %p105 = scmp.ne.s32.totalorder %s94, %s95
      %p106 = scmp.eq.s32.totalorder %s18, 0
      %p107 = por %p105, %p106
      %p108 = scmp.ne.s32.totalorder %s94, %s95
      %p109 = scmp.eq.s32.totalorder %s19, 1
      %p110 = por %p108, %p109
      %p112 = scmp.ne.s32.totalorder %s95, %s111
      %p113 = scmp.eq.s32.totalorder %s19, 0
      %p114 = por %p112, %p113
      %p115 = scmp.le.s32.totalorder 1, %s13
      %p116 = scmp.lt.s32.totalorder %s13, 3
      %p117 = pnand %p115, %p116
      %p118 = pneg %p117
      // Predicated region
      $region9: #{tpu_custom_call.1} parent=5 // pred_check
        _
      $region10: #{tpu_custom_call.1} parent=5 // pred_check_branch
        %120 = sbr.rel (%p117) target = $region12
      $region11: #{tpu_custom_call.1} parent=5 // pred_region
        %s121 = ssub.s32 %s13, 1
        // Predicated region
        $region13: #{tpu_custom_call.1} parent=11 // pred_check
          %p122 = pneg %p60
        $region14: #{tpu_custom_call.1} parent=11 // pred_check_branch
          %124 = sbr.rel (%p122) target = $region16
        $region15: #{tpu_custom_call.1} parent=11 // pred_region
          %s126 = ssub.s32 128, 128
          %127 = vsyncadd [#allocation3], %s126
          %s129 = sshll.u32 [#allocation2], 4
          %s130 = int_to_ptr.vmem [resolvable:$true] %s129
          %132 = dma.hbm_to_vmem [thread:$0]  %s1, 128, %s130, [#allocation3]
        $region16: #{tpu_custom_call.1} parent=11 // pred_fallthru
          _
        // Predicated region
        $region17: #{tpu_custom_call.1} parent=11 // pred_check
          %p133 = pneg %p81
        $region18: #{tpu_custom_call.1} parent=11 // pred_check_branch
          %135 = sbr.rel (%p133) target = $region20
        $region19: #{tpu_custom_call.1} parent=11 // pred_region
          _
        $region20: #{tpu_custom_call.1} parent=11 // pred_fallthru
          _
      $region12: #{tpu_custom_call.1} parent=5 // pred_fallthru
        _
      %p136 = scmp.lt.s32.totalorder %s13, 2
      // Predicated region
      $region21: #{tpu_custom_call.1} parent=5 // pred_check
        %p137 = pneg %p136
      $region22: #{tpu_custom_call.1} parent=5 // pred_check_branch
        %139 = sbr.rel (%p137) target = $region24
      $region23: #{tpu_custom_call.1} parent=5 // pred_region
        // Predicated region
        $region25: #{tpu_custom_call.1} parent=23 // pred_check
          %p140 = pneg %p33
        $region26: #{tpu_custom_call.1} parent=23 // pred_check_branch
          %142 = sbr.rel (%p140) target = $region28
        $region27: #{tpu_custom_call.1} parent=23 // pred_region
          %p143 = scmp.lt.s32.totalorder %s13, 1
          %s144 = scalar_select %p143, %s13, 1
          %s145 = smul.addr %s144, 4
          %s146 = scalar_lea.vmem %s0, %s145
        $region28: #{tpu_custom_call.1} parent=23 // pred_fallthru
          _
      $region24: #{tpu_custom_call.1} parent=5 // pred_fallthru
        _
      %p147 = scmp.le.s32.totalorder 1, %s13
      %p148 = scmp.lt.s32.totalorder %s13, 3
      %p149 = pnand %p147, %p148
      %p150 = pneg %p149
      // Predicated region
      $region29: #{tpu_custom_call.1} parent=5 // pred_check
        _
      $region30: #{tpu_custom_call.1} parent=5 // pred_check_branch
        %152 = sbr.rel (%p149) target = $region32
      $region31: #{tpu_custom_call.1} parent=5 // pred_region
        %s153 = ssub.s32 %s13, 1
        // Predicated region
        $region33: #{tpu_custom_call.1} parent=31 // pred_check
          %p154 = pneg %p60
        $region34: #{tpu_custom_call.1} parent=31 // pred_check_branch
          %156 = sbr.rel (%p154) target = $region36
        $region35: #{tpu_custom_call.1} parent=31 // pred_region
          %157 = dma.done [#allocation3], 128
        $region36: #{tpu_custom_call.1} parent=31 // pred_fallthru
          _
        %p158 = scmp.lt.s32.totalorder %s18, 1
        %s159 = scalar_select %p158, %s18, 1
        %s160 = smul.addr %s159, 4
        %s161 = scalar_lea.vmem %s0, %s160
        %p162 = pneg %p39
        %p163 = pneg %p36
        %p164 = pneg %p60
        %p165 = pneg %p57
        %p166 = pneg %p81
        %p167 = pneg %p78
        %p168 = pneg %p107
        %p169 = pneg %p104
        %s170 = sand.u32 %s94, 1
        %s171 = scalar_lea.sflag [#allocation4], %s170
        %s172 = sand.u32 %s94, 1
        %s173 = smul.addr %s172, 8
        %s174 = scalar_lea.vmem [#allocation5], %s173
        %p175 = scmp.lt.s32.totalorder %s18, 1
        %s176 = scalar_select %p175, %s18, 1
        %s177 = smul.addr %s176, 4
        %s178 = scalar_lea.vmem %s0, %s177
        %v179 = vld [vmem:[%s178] sm:$0xf]
        %181 = vrot.lane.b32.xlu0 %v179, 1
        %v182 = vpop.permute.xlu0 %181
        %vm184 = vcmask 7168
        %v185 = vsel %vm184, 0.0, %v182
        %186 = vrot.lane.b32.xlu0 %v179, 127
        %v187 = vpop.permute.xlu0 %186
        %vm189 = vcmask 1039360
        %v190 = vsel %vm189, %v187, 0.0
        %v191 = vrot.slane %v179, 4
        %vm193 = vcmask 1043456
        %v194 = vsel %vm193, %v185, %v191
        %v195 = vld [vmem:[#allocation2] sm:$0xff]
        %v196 = vld [vmem:[%s2] sm:$0xff]
        %198 = vset.pattern.permute.xlu0 0
        %199 = vperm.xlu0 %198, %v196
        %v200 = vpop.permute.xlu0 %199
        %vm202 = vcmask 97280
        %v204 = vsel %vm202, %v195, 0
        %v207 = vsel %vm193, %v190, 0
        %209 = vmatprep.subr.mxu0 0.0
        %210 = vmatpush1.msra.mxu0 0.0
        %211 = vmatprep.subr.mxu0 0.0
        %212 = vmatpush1.msra.mxu0 0.0
        %213 = vmatprep.subr.mxu0 0.0
        %214 = vmatpush1.msra.mxu0 0.0
        %215 = vmatprep.subr.mxu0 0.0
        %216 = vmatpush1.msra.mxu0 0.0
        %217 = vmatprep.subr.mxu0 0.0
        %218 = vmatpush1.msra.mxu0 0.0
        %219 = vmatprep.subr.mxu0 0.0
        %220 = vmatpush1.msra.mxu0 0.0
        %221 = vmatprep.subr.mxu0 0.0
        %222 = vmatpush1.msra.mxu0 0.0
        %223 = vmatprep.subr.mxu0 0.0
        %224 = vmatpush1.msra.mxu0 0.0
        %225 = vmatprep.subr.mxu0 0.0
        %226 = vmatpush1.msra.mxu0 0.0
        %227 = vmatprep.subr.mxu0 0.0
        %228 = vmatpush1.msra.mxu0 0.0
        %229 = vmatprep.subr.mxu0 0.0
        %230 = vmatpush1.msra.mxu0 0.0
        %231 = vmatprep.subr.mxu0 0.0
        %232 = vmatpush1.msra.mxu0 0.0
        %233 = vmatprep.subr.mxu0 0.0
        %234 = vmatpush1.msra.mxu0 0.0
        %235 = vmatprep.subr.mxu0 0.0
        %236 = vmatpush1.msra.mxu0 0.0
        %237 = vmatprep.subr.mxu0 0.0
        %238 = vmatpush1.msra.mxu0 %v207
        %239 = vmatprep.subr.mxu0 0.0
        %240 = vmatpush1.msra.mxu0 %v194
        %241 = vmatprep.subr.mxu0 0.0
        %242 = vmatpush2.msra.mxu0 0.0
        %243 = vmatprep.subr.mxu0 0.0
        %244 = vmatpush2.msra.mxu0 0.0
        %245 = vmatprep.subr.mxu0 0.0
        %246 = vmatpush2.msra.mxu0 0.0
        %247 = vmatprep.subr.mxu0 0.0
        %248 = vmatpush2.msra.mxu0 0.0
        %249 = vmatprep.subr.mxu0 0.0
        %250 = vmatpush2.msra.mxu0 0.0
        %251 = vmatprep.subr.mxu0 0.0
        %252 = vmatpush2.msra.mxu0 0.0
        %253 = vmatprep.subr.mxu0 0.0
        %254 = vmatpush2.msra.mxu0 0.0
        %255 = vmatprep.subr.mxu0 0.0
        %256 = vmatpush2.msra.mxu0 0.0
        %257 = vmatprep.subr.mxu0 0.0
        %258 = vmatpush2.msra.mxu0 0.0
        %259 = vmatprep.subr.mxu0 0.0
        %260 = vmatpush2.msra.mxu0 0.0
        %261 = vmatprep.subr.mxu0 0.0
        %262 = vmatpush2.msra.mxu0 0.0
        %263 = vmatprep.subr.mxu0 0.0
        %264 = vmatpush2.msra.mxu0 0.0
        %265 = vmatprep.subr.mxu0 0.0
        %266 = vmatpush2.msra.mxu0 0.0
        %267 = vmatprep.subr.mxu0 0.0
        %268 = vmatpush2.msra.mxu0 0.0
        %269 = vmatprep.subr.mxu0 0.0
        %270 = vmatpush2.msra.mxu0 0.0
        %271 = vmatprep.subr.mxu0 0.0
        %272 = vmatpush2.msra.mxu0 0.0
        %273 = vmatprep.mubr.f32.mxu0 0.0
        %274 = vmatmul.mubr.f32.gmra.mxu0 %v204
        %v275 = vpop.f32.mrf.mxu0
        %v276 = vadd.f32 %v200, %v275
        %v277 = vpop.f32.mrf.mxu0
        %278 = vdwg.mxu0
        %v279 = vmax.f32 %v276, 0.0
        %280 = vst [vmem:[%s174] sm:$0xff] %v279
        %s281 = sand.u32 %s94, 1
        %s282 = scalar_lea.sflag [#allocation4], %s281
        %s283 = sand.u32 %s94, 1
        %s284 = smul.addr %s283, 8
        %s285 = scalar_lea.vmem [#allocation5], %s284
        // Predicated region
        $region37: #{tpu_custom_call.1} parent=31 // pred_check
          %p286 = pneg %p104
        $region38: #{tpu_custom_call.1} parent=31 // pred_check_branch
          %288 = sbr.rel (%p286) target = $region40
        $region39: #{tpu_custom_call.1} parent=31 // pred_region
          %s290 = ssub.s32 128, 128
          %291 = vsyncadd %s282, %s290
          %s292 = smul.addr %s18, 128
          %s293 = scalar_lea.hbm %s3, %s292
          %s295 = sshll.u32 %s285, 4
          %s296 = int_to_ptr.vmem [resolvable:$true] %s295
          %298 = dma.vmem_to_hbm [thread:$0]  %s296, 128, %s293, %s282
        $region40: #{tpu_custom_call.1} parent=31 // pred_fallthru
          _
      $region32: #{tpu_custom_call.1} parent=5 // pred_fallthru
        _
      %p299 = scmp.le.s32.totalorder 2, %s13
      // Predicated region
      $region41: #{tpu_custom_call.1} parent=5 // pred_check
        %p300 = pneg %p299
      $region42: #{tpu_custom_call.1} parent=5 // pred_check_branch
        %302 = sbr.rel (%p300) target = $region44
      $region43: #{tpu_custom_call.1} parent=5 // pred_region
        %s303 = ssub.s32 %s13, 2
        // Predicated region
        $region45: #{tpu_custom_call.1} parent=43 // pred_check
          %p304 = pneg %p110
        $region46: #{tpu_custom_call.1} parent=43 // pred_check_branch
          %306 = sbr.rel (%p304) target = $region48
        $region47: #{tpu_custom_call.1} parent=43 // pred_region
          %s307 = sand.u32 %s95, 1
          %s308 = scalar_lea.sflag [#allocation4], %s307
          %s309 = sand.u32 %s95, 1
          %s310 = smul.addr %s309, 8
          %s311 = scalar_lea.vmem [#allocation5], %s310
          %312 = dma.done %s308, 128
        $region48: #{tpu_custom_call.1} parent=43 // pred_fallthru
          _
      $region44: #{tpu_custom_call.1} parent=5 // pred_fallthru
        _
    $region6: #{tpu_custom_call.1} parent=1 // loop_footer
      %s17 = sadd.s32 1, %s13
    $region7: #{tpu_custom_call.1} parent=1 // loop_footer_branch
      %12 = sbr.rel target = $region3
    $region8: #{tpu_custom_call.1} parent=1 // loop_exit
      _
    %313 = vsyncpa [#allocation3], 1
    %s314 = scalar_lea.sflag [#allocation3], 1
    %315 = vsyncpa %s314, 1
    %316 = vsyncpa [#allocation4], 1
    %s317 = scalar_lea.sflag [#allocation4], 1
    %318 = vsyncpa %s317, 1

</llo_original>
